<compile_context>
chip_gen: v6e
topology: v6e:2x2x1
jax: 0.10.0
libtpu: 0.0.40
codegen_flags: <defaults>
</compile_context>

<pallas_src>
import functools

import jax
import jax.numpy as jnp
from jax.experimental import pallas as pl
from jax.experimental.pallas import tpu as pltpu

EPS = 1e-5
MOMENTUM = 0.9

# Per-block budget for the x block alone (bytes).  With double-buffered input
# and output blocks the resident footprint is ~4x this (<= ~16 MiB), which fits
# the scoped-VMEM limit below on every generation (v5e/v6e/v7x).
_X_BLOCK_BUDGET_BYTES = 4 * 1024 * 1024
_VMEM_LIMIT_BYTES = 32 * 1024 * 1024


def _choose_c_block_single_pass(n, c, hw, itemsize, budget):
    """Channel block for the fused single-pass path, or None if it can't fit."""
    per_channel_bytes = n * hw * itemsize
    max_cb = budget // max(per_channel_bytes, 1)
    if c <= max_cb:
        return c                       # whole channel dim in one block
    cb = (max_cb // 8) * 8             # keep sublane alignment
    return int(cb) if cb >= 8 else None


def _choose_blocks_two_pass(n, c, hw, itemsize, budget):
    """(c_blk, n_blk) for the two-pass path; n_blk divides N exactly."""
    c_blk = min(c, 8)
    n_blk = 1
    for nb in range(n, 0, -1):
        if n % nb == 0 and nb * c_blk * hw * itemsize <= budget:
            n_blk = nb
            break
    return c_blk, n_blk


# ---------------------------------------------------------------------------
# Fast path: whole (N, C_blk, HW) slab resident -> fused stats + normalize.
# ---------------------------------------------------------------------------
def _bn_fused_kernel(x_ref, gamma_ref, beta_ref, mm_ref, mv_ref,
                     y_ref, nmm_ref, nmv_ref, *, eps, momentum, m):
    # x_ref: (N, C_blk, HW); gamma/beta/mm/mv refs: (1, C_blk, 1)
    x = x_ref[...].astype(jnp.float32)
    inv_m = 1.0 / m

    # Per-channel sums: reduce lanes (HW) first, then N.
    s1 = jnp.sum(jnp.sum(x, axis=2, keepdims=True), axis=0, keepdims=True)
    s2 = jnp.sum(jnp.sum(x * x, axis=2, keepdims=True), axis=0, keepdims=True)
    mean = s1 * inv_m                                  # (1, Cb, 1)
    var = jnp.maximum(s2 * inv_m - mean * mean, 0.0)   # biased, clamped >= 0

    inv_std = jax.lax.rsqrt(var + eps)
    gamma = gamma_ref[...].astype(jnp.float32)
    beta = beta_ref[...].astype(jnp.float32)

    # Fold affine into per-channel scale/shift: y = x * scale + shift
    scale = gamma * inv_std
    shift = beta - mean * scale
    y_ref[...] = (x * scale + shift).astype(y_ref.dtype)

    nmm_ref[...] = (momentum * mm_ref[...].astype(jnp.float32)
                    + (1.0 - momentum) * mean).astype(nmm_ref.dtype)
    nmv_ref[...] = (momentum * mv_ref[...].astype(jnp.float32)
                    + (1.0 - momentum) * var).astype(nmv_ref.dtype)


# ---------------------------------------------------------------------------
# Fallback path, pass 1: per-channel stats reduced over N blocks.
# ---------------------------------------------------------------------------
def _bn_stats_kernel(x_ref, gamma_ref, beta_ref, mm_ref, mv_ref,
                     scale_ref, shift_ref, nmm_ref, nmv_ref,
                     s1_ref, s2_ref, *, eps, momentum, m):
    ni = pl.program_id(1)

    @pl.when(ni == 0)
    def _():
        s1_ref[...] = jnp.zeros_like(s1_ref)
        s2_ref[...] = jnp.zeros_like(s2_ref)

    x = x_ref[...].astype(jnp.float32)                 # (n_blk, C_blk, HW)
    s1_ref[...] += jnp.sum(jnp.sum(x, axis=2, keepdims=True),
                           axis=0, keepdims=True)
    s2_ref[...] += jnp.sum(jnp.sum(x * x, axis=2, keepdims=True),
                           axis=0, keepdims=True)

    @pl.when(ni == pl.num_programs(1) - 1)
    def _():
        inv_m = 1.0 / m
        mean = s1_ref[...] * inv_m
        var = jnp.maximum(s2_ref[...] * inv_m - mean * mean, 0.0)
        inv_std = jax.lax.rsqrt(var + eps)
        gamma = gamma_ref[...].astype(jnp.float32)
        beta = beta_ref[...].astype(jnp.float32)
        scale = gamma * inv_std
        scale_ref[...] = scale
        shift_ref[...] = beta - mean * scale
        nmm_ref[...] = (momentum * mm_ref[...].astype(jnp.float32)
                        + (1.0 - momentum) * mean).astype(nmm_ref.dtype)
        nmv_ref[...] = (momentum * mv_ref[...].astype(jnp.float32)
                        + (1.0 - momentum) * var).astype(nmv_ref.dtype)


# ---------------------------------------------------------------------------
# Fallback path, pass 2: fused y = x * scale + shift.
# ---------------------------------------------------------------------------
def _bn_apply_kernel(x_ref, scale_ref, shift_ref, y_ref):
    x = x_ref[...].astype(jnp.float32)
    y_ref[...] = (x * scale_ref[...] + shift_ref[...]).astype(y_ref.dtype)


def batch_norm_pallas(x_nchw, gamma, beta, moving_mean, moving_var,
                      eps=EPS, momentum=MOMENTUM,
                      x_block_budget_bytes=_X_BLOCK_BUDGET_BYTES):
    """Training-mode BatchNorm forward.

    x_nchw:       (N, C, H, W)
    gamma/beta:   (1, C, 1, 1)
    moving_mean/
    moving_var:   (1, C, 1, 1)
    Returns (Y in NCHW, new_moving_mean, new_moving_var) matching PyTorch shapes.
    """
    n, c, h, w = x_nchw.shape
    hw = h * w
    m = float(n * hw)

    # Free reshapes only (no transposes / extra HBM copies).
    x3 = x_nchw.reshape(n, c, hw)
    g = gamma.reshape(1, c, 1)
    b = beta.reshape(1, c, 1)
    mm = moving_mean.reshape(1, c, 1)
    mv = moving_var.reshape(1, c, 1)

    itemsize = x3.dtype.itemsize
    compiler_params = lambda sems: pltpu.CompilerParams(
        dimension_semantics=sems, vmem_limit_bytes=_VMEM_LIMIT_BYTES)

    c_blk = _choose_c_block_single_pass(n, c, hw, itemsize, x_block_budget_bytes)

    if c_blk is not None:
        # -------- single fused pass over channel blocks --------
        grid = (pl.cdiv(c, c_blk),)
        x_spec = pl.BlockSpec((n, c_blk, hw), lambda ci: (0, ci, 0))
        vec_spec = pl.BlockSpec((1, c_blk, 1), lambda ci: (0, ci, 0))

        kernel = functools.partial(_bn_fused_kernel, eps=eps,
                                   momentum=momentum, m=m)
        y3, nmm, nmv = pl.pallas_call(
            kernel,
            grid=grid,
            out_shape=(
                jax.ShapeDtypeStruct((n, c, hw), x3.dtype),
                jax.ShapeDtypeStruct((1, c, 1), moving_mean.dtype),
                jax.ShapeDtypeStruct((1, c, 1), moving_var.dtype),
            ),
            in_specs=[x_spec, vec_spec, vec_spec, vec_spec, vec_spec],
            out_specs=(x_spec, vec_spec, vec_spec),
            compiler_params=compiler_params(("parallel",)),
        )(x3, g, b, mm, mv)
    else:
        # -------- two-pass fallback: stats reduction, then normalize --------
        c_blk, n_blk = _choose_blocks_two_pass(n, c, hw, itemsize,
                                               x_block_budget_bytes)
        grid = (pl.cdiv(c, c_blk), n // n_blk)
        x_spec = pl.BlockSpec((n_blk, c_blk, hw), lambda ci, ni: (ni, ci, 0))
        vec_spec = pl.BlockSpec((1, c_blk, 1), lambda ci, ni: (0, ci, 0))

        stats_kernel = functools.partial(_bn_stats_kernel, eps=eps,
                                         momentum=momentum, m=m)
        scale, shift, nmm, nmv = pl.pallas_call(
            stats_kernel,
            grid=grid,
            out_shape=(
                jax.ShapeDtypeStruct((1, c, 1), jnp.float32),
                jax.ShapeDtypeStruct((1, c, 1), jnp.float32),
                jax.ShapeDtypeStruct((1, c, 1), moving_mean.dtype),
                jax.ShapeDtypeStruct((1, c, 1), moving_var.dtype),
            ),
            in_specs=[x_spec, vec_spec, vec_spec, vec_spec, vec_spec],
            out_specs=(vec_spec, vec_spec, vec_spec, vec_spec),
            scratch_shapes=[pltpu.VMEM((1, c_blk, 1), jnp.float32),
                            pltpu.VMEM((1, c_blk, 1), jnp.float32)],
            compiler_params=compiler_params(("parallel", "arbitrary")),
        )(x3, g, b, mm, mv)

        y3 = pl.pallas_call(
            _bn_apply_kernel,
            grid=grid,
            out_shape=jax.ShapeDtypeStruct((n, c, hw), x3.dtype),
            in_specs=[x_spec, vec_spec, vec_spec],
            out_specs=x_spec,
            compiler_params=compiler_params(("parallel", "parallel")),
        )(x3, scale, shift)

    y = y3.reshape(n, c, h, w)
    return y, nmm.reshape(1, c, 1, 1), nmv.reshape(1, c, 1, 1)


def _reference(x, gamma, beta, moving_mean, moving_var, eps, momentum):
    # pure-JAX mirror of the PyTorch training path
    mean = jnp.mean(x, axis=(0, 2, 3), keepdims=True)
    var = jnp.mean((x - mean) ** 2, axis=(0, 2, 3), keepdims=True)
    x_hat = (x - mean) / jnp.sqrt(var + eps)
    y = gamma * x_hat + beta
    new_mm = momentum * moving_mean + (1.0 - momentum) * mean
    new_mv = momentum * moving_var + (1.0 - momentum) * var
    return y, new_mm, new_mv


def _check(x, budget):
    c = x.shape[1]
    gamma = jnp.ones((1, c, 1, 1), dtype=jnp.float32)
    beta = jnp.zeros((1, c, 1, 1), dtype=jnp.float32)
    moving_mean = jnp.zeros((1, c, 1, 1), dtype=jnp.float32)
    moving_var = jnp.zeros((1, c, 1, 1), dtype=jnp.float32)

    y, nmm, nmv = batch_norm_pallas(x, gamma, beta, moving_mean, moving_var,
                                    x_block_budget_bytes=budget)
    jax.block_until_ready((y, nmm, nmv))

    y_ref, mm_ref, mv_ref = _reference(x, gamma, beta, moving_mean, moving_var,
                                       EPS, MOMENTUM)
    assert jnp.allclose(y, y_ref, atol=1e-5, rtol=1e-5)
    assert jnp.allclose(nmm, mm_ref, atol=1e-5, rtol=1e-5)
    assert jnp.allclose(nmv, mv_ref, atol=1e-5, rtol=1e-5)


if __name__ == "__main__":
    key = jax.random.PRNGKey(0)
    k1, k2 = jax.random.split(key)

    # Fast fused path (matches the BatchNorm(num_dims=4) spec shapes).
    x1 = jax.random.normal(k1, (2, 4, 16, 16), dtype=jnp.float32)
    _check(x1, _X_BLOCK_BUDGET_BYTES)

    # Two-pass fallback path, forced via a tiny per-block budget.
    x2 = jax.random.normal(k2, (4, 16, 8, 16), dtype=jnp.float32)
    _check(x2, 4 * 1024)

    print("KERNEL_OK")
</pallas_src>

<mosaic_0001>
module attributes {stable_mosaic.version = 11 : i64} {
  func.func @_bn_fused_kernel(%arg0: i32, %arg1: memref<2x4x256xf32, #tpu.memory_space<vmem>>, %arg2: memref<1x4x1xf32, #tpu.memory_space<vmem>>, %arg3: memref<1x4x1xf32, #tpu.memory_space<vmem>>, %arg4: memref<1x4x1xf32, #tpu.memory_space<vmem>>, %arg5: memref<1x4x1xf32, #tpu.memory_space<vmem>>, %arg6: memref<2x4x256xf32, #tpu.memory_space<vmem>>, %arg7: memref<1x4x1xf32, #tpu.memory_space<vmem>>, %arg8: memref<1x4x1xf32, #tpu.memory_space<vmem>>) attributes {dimension_semantics = [#tpu.dimension_semantics<parallel>], iteration_bounds = array<i64: 1>, scalar_prefetch = 0 : i64, scratch_operands = 0 : i64, tpu.core_type = #tpu.core_type<tc>, window_params = [{transform_indices = @transform_0, window_bounds = array<i64: 2, 4, 256>}, {transform_indices = @transform_1, window_bounds = array<i64: 1, 4, 1>}, {transform_indices = @transform_2, window_bounds = array<i64: 1, 4, 1>}, {transform_indices = @transform_3, window_bounds = array<i64: 1, 4, 1>}, {transform_indices = @transform_4, window_bounds = array<i64: 1, 4, 1>}, {transform_indices = @transform_5, window_bounds = array<i64: 2, 4, 256>}, {transform_indices = @transform_6, window_bounds = array<i64: 1, 4, 1>}, {transform_indices = @transform_7, window_bounds = array<i64: 1, 4, 1>}]} {
    %c0 = arith.constant 0 : index
    %c0_0 = arith.constant 0 : index
    %c0_1 = arith.constant 0 : index
    %0 = vector.load %arg1[%c0, %c0_0, %c0_1] : memref<2x4x256xf32, #tpu.memory_space<vmem>>, vector<2x4x256xf32>
    %cst = arith.constant dense<0.000000e+00> : vector<2x4xf32>
    %1 = vector.multi_reduction <add>, %0, %cst [2] : vector<2x4x256xf32> to vector<2x4xf32>
    %2 = vector.shape_cast %1 : vector<2x4xf32> to vector<2x4x1xf32>
    %cst_2 = arith.constant dense<0.000000e+00> : vector<4x1xf32>
    %3 = vector.multi_reduction <add>, %2, %cst_2 [0] : vector<2x4x1xf32> to vector<4x1xf32>
    %4 = vector.shape_cast %3 : vector<4x1xf32> to vector<1x4x1xf32>
    %5 = arith.mulf %0, %0 : vector<2x4x256xf32>
    %cst_3 = arith.constant dense<0.000000e+00> : vector<2x4xf32>
    %6 = vector.multi_reduction <add>, %5, %cst_3 [2] : vector<2x4x256xf32> to vector<2x4xf32>
    %7 = vector.shape_cast %6 : vector<2x4xf32> to vector<2x4x1xf32>
    %cst_4 = arith.constant dense<0.000000e+00> : vector<4x1xf32>
    %8 = vector.multi_reduction <add>, %7, %cst_4 [0] : vector<2x4x1xf32> to vector<4x1xf32>
    %9 = vector.shape_cast %8 : vector<4x1xf32> to vector<1x4x1xf32>
    %cst_5 = arith.constant 0.001953125 : f32
    %10 = vector.broadcast %cst_5 : f32 to vector<1x4x1xf32>
    %11 = arith.mulf %4, %10 : vector<1x4x1xf32>
    %cst_6 = arith.constant 0.001953125 : f32
    %12 = vector.broadcast %cst_6 : f32 to vector<1x4x1xf32>
    %13 = arith.mulf %9, %12 : vector<1x4x1xf32>
    %14 = arith.mulf %11, %11 : vector<1x4x1xf32>
    %15 = arith.subf %13, %14 : vector<1x4x1xf32>
    %cst_7 = arith.constant 0.000000e+00 : f32
    %16 = vector.broadcast %cst_7 : f32 to vector<1x4x1xf32>
    %17 = arith.maximumf %15, %16 : vector<1x4x1xf32>
    %cst_8 = arith.constant 9.99999974E-6 : f32
    %18 = vector.broadcast %cst_8 : f32 to vector<1x4x1xf32>
    %19 = arith.addf %17, %18 : vector<1x4x1xf32>
    %20 = math.rsqrt %19 : vector<1x4x1xf32>
    %c0_9 = arith.constant 0 : index
    %c0_10 = arith.constant 0 : index
    %c0_11 = arith.constant 0 : index
    %21 = vector.load %arg2[%c0_9, %c0_10, %c0_11] : memref<1x4x1xf32, #tpu.memory_space<vmem>>, vector<1x4x1xf32>
    %c0_12 = arith.constant 0 : index
    %c0_13 = arith.constant 0 : index
    %c0_14 = arith.constant 0 : index
    %22 = vector.load %arg3[%c0_12, %c0_13, %c0_14] : memref<1x4x1xf32, #tpu.memory_space<vmem>>, vector<1x4x1xf32>
    %23 = arith.mulf %21, %20 : vector<1x4x1xf32>
    %24 = arith.mulf %11, %23 : vector<1x4x1xf32>
    %25 = arith.subf %22, %24 : vector<1x4x1xf32>
    %26 = vector.broadcast %23 : vector<1x4x1xf32> to vector<2x4x256xf32>
    %27 = arith.mulf %0, %26 : vector<2x4x256xf32>
    %28 = vector.broadcast %25 : vector<1x4x1xf32> to vector<2x4x256xf32>
    %29 = arith.addf %27, %28 : vector<2x4x256xf32>
    %c0_15 = arith.constant 0 : index
    %c0_16 = arith.constant 0 : index
    %c0_17 = arith.constant 0 : index
    %30 = vector.load %arg6[%c0_15, %c0_16, %c0_17] : memref<2x4x256xf32, #tpu.memory_space<vmem>>, vector<2x4x256xf32>
    tpu.vector_store %arg6[%c0_15, %c0_16, %c0_17], %29 {strides = array<i32>} : memref<2x4x256xf32, #tpu.memory_space<vmem>>, vector<2x4x256xf32>,
    %c0_18 = arith.constant 0 : index
    %c0_19 = arith.constant 0 : index
    %c0_20 = arith.constant 0 : index
    %31 = vector.load %arg4[%c0_18, %c0_19, %c0_20] : memref<1x4x1xf32, #tpu.memory_space<vmem>>, vector<1x4x1xf32>
    %cst_21 = arith.constant 0.899999976 : f32
    %32 = vector.broadcast %cst_21 : f32 to vector<1x4x1xf32>
    %33 = arith.mulf %32, %31 : vector<1x4x1xf32>
    %cst_22 = arith.constant 1.000000e-01 : f32
    %34 = vector.broadcast %cst_22 : f32 to vector<1x4x1xf32>
    %35 = arith.mulf %34, %11 : vector<1x4x1xf32>
    %36 = arith.addf %33, %35 : vector<1x4x1xf32>
    %c0_23 = arith.constant 0 : index
    %c0_24 = arith.constant 0 : index
    %c0_25 = arith.constant 0 : index
    %37 = vector.load %arg7[%c0_23, %c0_24, %c0_25] : memref<1x4x1xf32, #tpu.memory_space<vmem>>, vector<1x4x1xf32>
    tpu.vector_store %arg7[%c0_23, %c0_24, %c0_25], %36 {strides = array<i32>} : memref<1x4x1xf32, #tpu.memory_space<vmem>>, vector<1x4x1xf32>,
    %c0_26 = arith.constant 0 : index
    %c0_27 = arith.constant 0 : index
    %c0_28 = arith.constant 0 : index
    %38 = vector.load %arg5[%c0_26, %c0_27, %c0_28] : memref<1x4x1xf32, #tpu.memory_space<vmem>>, vector<1x4x1xf32>
    %cst_29 = arith.constant 0.899999976 : f32
    %39 = vector.broadcast %cst_29 : f32 to vector<1x4x1xf32>
    %40 = arith.mulf %39, %38 : vector<1x4x1xf32>
    %cst_30 = arith.constant 1.000000e-01 : f32
    %41 = vector.broadcast %cst_30 : f32 to vector<1x4x1xf32>
    %42 = arith.mulf %41, %17 : vector<1x4x1xf32>
    %43 = arith.addf %40, %42 : vector<1x4x1xf32>
    %c0_31 = arith.constant 0 : index
    %c0_32 = arith.constant 0 : index
    %c0_33 = arith.constant 0 : index
    %44 = vector.load %arg8[%c0_31, %c0_32, %c0_33] : memref<1x4x1xf32, #tpu.memory_space<vmem>>, vector<1x4x1xf32>
    tpu.vector_store %arg8[%c0_31, %c0_32, %c0_33], %43 {strides = array<i32>} : memref<1x4x1xf32, #tpu.memory_space<vmem>>, vector<1x4x1xf32>,
    return
  }
  func.func @transform_0(%arg0: i32) -> (i32, i32, i32) {
    %c0_i32 = arith.constant 0 : i32
    %c0_i32_0 = arith.constant 0 : i32
    %c0_i32_1 = arith.constant 0 : i32
    return %c0_i32, %arg0, %c0_i32_0 : i32, i32, i32
  }
  func.func @transform_1(%arg0: i32) -> (i32, i32, i32) {
    %c0_i32 = arith.constant 0 : i32
    %c0_i32_0 = arith.constant 0 : i32
    %c0_i32_1 = arith.constant 0 : i32
    return %c0_i32, %arg0, %c0_i32_0 : i32, i32, i32
  }
  func.func @transform_2(%arg0: i32) -> (i32, i32, i32) {
    %c0_i32 = arith.constant 0 : i32
    %c0_i32_0 = arith.constant 0 : i32
    %c0_i32_1 = arith.constant 0 : i32
    return %c0_i32, %arg0, %c0_i32_0 : i32, i32, i32
  }
  func.func @transform_3(%arg0: i32) -> (i32, i32, i32) {
    %c0_i32 = arith.constant 0 : i32
    %c0_i32_0 = arith.constant 0 : i32
    %c0_i32_1 = arith.constant 0 : i32
    return %c0_i32, %arg0, %c0_i32_0 : i32, i32, i32
  }
  func.func @transform_4(%arg0: i32) -> (i32, i32, i32) {
    %c0_i32 = arith.constant 0 : i32
    %c0_i32_0 = arith.constant 0 : i32
    %c0_i32_1 = arith.constant 0 : i32
    return %c0_i32, %arg0, %c0_i32_0 : i32, i32, i32
  }
  func.func @transform_5(%arg0: i32) -> (i32, i32, i32) {
    %c0_i32 = arith.constant 0 : i32
    %c0_i32_0 = arith.constant 0 : i32
    %c0_i32_1 = arith.constant 0 : i32
    return %c0_i32, %arg0, %c0_i32_0 : i32, i32, i32
  }
  func.func @transform_6(%arg0: i32) -> (i32, i32, i32) {
    %c0_i32 = arith.constant 0 : i32
    %c0_i32_0 = arith.constant 0 : i32
    %c0_i32_1 = arith.constant 0 : i32
    return %c0_i32, %arg0, %c0_i32_0 : i32, i32, i32
  }
  func.func @transform_7(%arg0: i32) -> (i32, i32, i32) {
    %c0_i32 = arith.constant 0 : i32
    %c0_i32_0 = arith.constant 0 : i32
    %c0_i32_1 = arith.constant 0 : i32
    return %c0_i32, %arg0, %c0_i32_0 : i32, i32, i32
  }
}

</mosaic_0001>

<llo_original>
// kernel: tpu_custom_call.1
$region0: #{tpu_custom_call.1}
  #allocation0 [shape = 'u32[]', space=smem, size = 0x4, offset = 0x4, fixed_abs, tag = 'smem constant byte address 0x4 - core index']
  #allocation1 [shape = 'u32[144,128]{1,0:T(1,128)}', space=vmem, size = 0x12000, scoped, tag = 'internal scratch']
  %s0 = inlined_call_operand.vmem [shape: f32[2,4,256], index: 0, kind: input, shape index: {}]
  %s1 = inlined_call_operand.vmem [shape: f32[1,4,1], index: 1, kind: input, shape index: {}]
  %s2 = inlined_call_operand.vmem [shape: f32[1,4,1], index: 2, kind: input, shape index: {}]
  %s3 = inlined_call_operand.vmem [shape: f32[1,4,1], index: 3, kind: input, shape index: {}]
  %s4 = inlined_call_operand.vmem [shape: f32[1,4,1], index: 4, kind: input, shape index: {}]
  %s5 = inlined_call_operand.hbm [shape: f32[2,4,256], index: 5, kind: output, shape index: {0}]
  %s6 = inlined_call_operand.vmem [shape: f32[1,4,1], index: 6, kind: output, shape index: {1}]
  %s7 = inlined_call_operand.vmem [shape: f32[1,4,1], index: 7, kind: output, shape index: {2}]
  %8 = xla_tuple %s5, %s6, %s7
  %s9 = sld [smem:[#allocation0]]
  $region46: #{tpu_custom_call.1} parent=0
    _
  %s11 = ssub.s32 1, %s9
  %s12 = scalar_select 0, %s11, %s9
  $region1: #{tpu_custom_call.1} parent=0
    #allocation2 [shape = 'u8[8192]{0}', space=vmem, size = 0x2000, scoped, tag = 'output window, operand 0, single buffered']
    #allocation3 [shape = 's32[1]{0}', space=sflag, size = 0x4, scoped, tag = 'scoped memory for tpu_custom_call.1']
    %13 = vsyncpa [#allocation3], 0
    // Predicated region
    $region2: #{tpu_custom_call.1} parent=1 // pred_check
      _
    $region3: #{tpu_custom_call.1} parent=1 // pred_check_branch
      %15 = sbr.rel (0) target = $region5
    $region4: #{tpu_custom_call.1} parent=1 // pred_region
      _
    $region5: #{tpu_custom_call.1} parent=1 // pred_fallthru
      _
    // Predicated region
    $region6: #{tpu_custom_call.1} parent=1 // pred_check
      _
    $region7: #{tpu_custom_call.1} parent=1 // pred_check_branch
      %17 = sbr.rel (0) target = $region9
    $region8: #{tpu_custom_call.1} parent=1 // pred_region
      _
    $region9: #{tpu_custom_call.1} parent=1 // pred_fallthru
      _
    // Predicated region
    $region10: #{tpu_custom_call.1} parent=1 // pred_check
      _
    $region11: #{tpu_custom_call.1} parent=1 // pred_check_branch
      %19 = sbr.rel (0) target = $region13
    $region12: #{tpu_custom_call.1} parent=1 // pred_region
      _
    $region13: #{tpu_custom_call.1} parent=1 // pred_fallthru
      _
    // Predicated region
    $region14: #{tpu_custom_call.1} parent=1 // pred_check
      _
    $region15: #{tpu_custom_call.1} parent=1 // pred_check_branch
      %21 = sbr.rel (0) target = $region17
    $region16: #{tpu_custom_call.1} parent=1 // pred_region
      _
    $region17: #{tpu_custom_call.1} parent=1 // pred_fallthru
      _
    // Predicated region
    $region18: #{tpu_custom_call.1} parent=1 // pred_check
      _
    $region19: #{tpu_custom_call.1} parent=1 // pred_check_branch
      %23 = sbr.rel (0) target = $region21
    $region20: #{tpu_custom_call.1} parent=1 // pred_region
      _
    $region21: #{tpu_custom_call.1} parent=1 // pred_fallthru
      _
    %v24 = vld [vmem:[%s0] sm:$0xff]
    %v25 = vld [vmem:[%s0 + $0x8] sm:$0xff]
    %v28 = vcombine.high %v24, %v24
    %v29 = vcombine.high %v25, %v25
    %vm32 = vcmask 1043456
    %v33 = vsel %vm32, %v24, 0.0
    %v34 = vsel %vm32, %v28, 0.0
    %v35 = vadd.f32 %v33, %v34
    %36 = vadd.xlane.f32.xlu0 %v35
    %v37 = vpop.xlane.xlu0 %36
    %v38 = vsel %vm32, %v25, 0.0
    %v39 = vsel %vm32, %v29, 0.0
    %v40 = vadd.f32 %v38, %v39
    %41 = vadd.xlane.f32.xlu0 %v40
    %v42 = vpop.xlane.xlu0 %41
    %v43 = vsel %vm32, %v37, 0.0
    %v44 = vsel %vm32, %v42, 0.0
    %v45 = vadd.f32 %v43, %v44
    %v46 = vmul.f32 %v24, %v24
    %v47 = vmul.f32 %v25, %v25
    %v50 = vcombine.high %v46, %v46
    %v51 = vcombine.high %v47, %v47
    %v54 = vsel %vm32, %v46, 0.0
    %v55 = vsel %vm32, %v50, 0.0
    %v56 = vadd.f32 %v54, %v55
    %57 = vadd.xlane.f32.xlu0 %v56
    %v58 = vpop.xlane.xlu0 %57
    %v59 = vsel %vm32, %v47, 0.0
    %v60 = vsel %vm32, %v51, 0.0
    %v61 = vadd.f32 %v59, %v60
    %62 = vadd.xlane.f32.xlu0 %v61
    %v63 = vpop.xlane.xlu0 %62
    %v64 = vsel %vm32, %v58, 0.0
    %v65 = vsel %vm32, %v63, 0.0
    %v66 = vadd.f32 %v64, %v65
    %v67 = vmul.f32 %v45, 0.001953125
    %v68 = vmul.f32 %v66, 0.001953125
    %v69 = vmul.f32 %v67, %v67
    %v70 = vsub.f32 %v68, %v69
    %v71 = vmax.f32 %v70, 0.0
    %v72 = vadd.f32 %v71, 1e-05
    %v73 = vrsqrt.pop %v72
    %v74 = vld [vmem:[%s1] sm:$0xf]
    %v75 = vld [vmem:[%s2] sm:$0xf]
    %v76 = vmul.f32 %v74, %v73
    %v77 = vmul.f32 %v67, %v76
    %v78 = vsub.f32 %v75, %v77
    %80 = vset.pattern.permute.xlu0 0
    %81 = vperm.xlu0 %80, %v76
    %v82 = vpop.permute.xlu0 %81
    %v84 = vunpack.c.l.s4 839922192
    %v85 = vunpack.c.0.s8 %v84
    %v86 = vlaneseq
    %v87 = vshrl.u32 %v86, 7
    %v88 = vsub.s32 %v85, %v87
    %v89 = vrot.slane %v82, %v88
    %v91 = vmul.f32 %v24, %v89
    %v92 = vmul.f32 %v25, %v89
    %94 = vset.pattern.permute.xlu0 0
    %95 = vperm.xlu0 %94, %v78
    %v96 = vpop.permute.xlu0 %95
    %v98 = vunpack.c.l.s4 839922192
    %v99 = vunpack.c.0.s8 %v98
    %v100 = vlaneseq
    %v101 = vshrl.u32 %v100, 7
    %v102 = vsub.s32 %v99, %v101
    %v103 = vrot.slane %v96, %v102
    %v105 = vadd.f32 %v91, %v103
    %v106 = vadd.f32 %v92, %v103
    %107 = vst [vmem:[#allocation2] sm:$0xff] %v105
    %108 = vst [vmem:[#allocation2 + $0x8] sm:$0xff] %v106
    %v109 = vld [vmem:[%s3] sm:$0xf]
    %v110 = vmul.f32 %v109, 0.9
    %v111 = vmul.f32 %v67, 0.1
    %v112 = vadd.f32 %v110, %v111
    %vm113 = vcmask 3072
    %114 = vst.msk [vmem:[%s6] sm:$0xf] %vm113, %v112
    %v115 = vld [vmem:[%s4] sm:$0xf]
    %v116 = vmul.f32 %v115, 0.9
    %v117 = vmul.f32 %v71, 0.1
    %v118 = vadd.f32 %v116, %v117
    %119 = vst.msk [vmem:[%s7] sm:$0xf] %vm113, %v118
    // Predicated region
    $region22: #{tpu_custom_call.1} parent=1 // pred_check
      _
    $region23: #{tpu_custom_call.1} parent=1 // pred_check_branch
      %121 = sbr.rel (0) target = $region25
    $region24: #{tpu_custom_call.1} parent=1 // pred_region
      %s123 = ssub.s32 256, 256
      %124 = vsyncadd [#allocation3], %s123
      %s125 = sshll.u32 [#allocation2], 4
      %s126 = int_to_ptr.vmem [resolvable:$true] %s125
      %131 = dma.vmem_to_hbm [thread:$0]  %s126, 256, %s5, [#allocation3], 128, 128, 8
    $region25: #{tpu_custom_call.1} parent=1 // pred_fallthru
      _
    // Predicated region
    $region26: #{tpu_custom_call.1} parent=1 // pred_check
      _
    $region27: #{tpu_custom_call.1} parent=1 // pred_check_branch
      %133 = sbr.rel (0) target = $region29
    $region28: #{tpu_custom_call.1} parent=1 // pred_region
      _
    $region29: #{tpu_custom_call.1} parent=1 // pred_fallthru
      _
    // Predicated region
    $region30: #{tpu_custom_call.1} parent=1 // pred_check
      _
    $region31: #{tpu_custom_call.1} parent=1 // pred_check_branch
      %135 = sbr.rel (0) target = $region33
    $region32: #{tpu_custom_call.1} parent=1 // pred_region
      _
    $region33: #{tpu_custom_call.1} parent=1 // pred_fallthru
      _
    // Predicated region
    $region34: #{tpu_custom_call.1} parent=1 // pred_check
      _
    $region35: #{tpu_custom_call.1} parent=1 // pred_check_branch
      %137 = sbr.rel (0) target = $region37
    $region36: #{tpu_custom_call.1} parent=1 // pred_region
      %138 = dma.done [#allocation3], 256
    $region37: #{tpu_custom_call.1} parent=1 // pred_fallthru
      _
    // Predicated region
    $region38: #{tpu_custom_call.1} parent=1 // pred_check
      _
    $region39: #{tpu_custom_call.1} parent=1 // pred_check_branch
      %140 = sbr.rel (0) target = $region41
    $region40: #{tpu_custom_call.1} parent=1 // pred_region
      _
    $region41: #{tpu_custom_call.1} parent=1 // pred_fallthru
      _
    // Predicated region
    $region42: #{tpu_custom_call.1} parent=1 // pred_check
      _
    $region43: #{tpu_custom_call.1} parent=1 // pred_check_branch
      %142 = sbr.rel (0) target = $region45
    $region44: #{tpu_custom_call.1} parent=1 // pred_region
      _
    $region45: #{tpu_custom_call.1} parent=1 // pred_fallthru
      _
    %143 = vsyncpa [#allocation3], 1

</llo_original>
